<compile_context>
chip_gen: v7x
topology: tpu7x:2x2x1
jax: 0.10.0
libtpu: 0.0.40
codegen_flags: <defaults>
</compile_context>

<pallas_src>
import functools

import jax
import jax.numpy as jnp
from jax.experimental import pallas as pl
from jax.experimental.pallas import tpu as pltpu


# ----------------------------------------------------------------------------
# Pallas kernel: fused  out = relu(z @ W1 + b1) @ W2 + b2
# ----------------------------------------------------------------------------
def _odefunc_kernel(z_ref, w1_ref, b1_ref, w2_ref, b2_ref, o_ref):
    # z_ref : (tm, dim)      f32  (cast to bf16 in-kernel, hidden under DMA/MXU)
    # w1_ref: (dim, hidden)  bf16     b1_ref: (1, hidden) f32
    # w2_ref: (hidden, dim)  bf16     b2_ref: (1, dim)    f32
    # o_ref : (tm, dim)      f32
    z_bf16 = z_ref[...].astype(jnp.bfloat16)
    h = jnp.dot(z_bf16, w1_ref[...], preferred_element_type=jnp.float32)
    h = jnp.maximum(h + b1_ref[...], 0.0)          # bias + ReLU in f32 (VPU)
    h = h.astype(jnp.bfloat16)                     # bf16 into the 2nd MXU pass
    y = jnp.dot(h, w2_ref[...], preferred_element_type=jnp.float32)
    o_ref[...] = (y + b2_ref[...]).astype(o_ref.dtype)


# ----------------------------------------------------------------------------
# Tile-size selection (per-generation aware, but never fails)
# ----------------------------------------------------------------------------
def _num_tensorcores():
    """Best-effort TensorCore count (v5e/v6e: 1, v7x: 2). Defaults to 1."""
    try:
        info = pltpu.get_tpu_info()
        for attr in ("num_cores", "core_count", "num_tensorcores"):
            n = getattr(info, attr, None)
            if n:
                return int(n)
    except Exception:
        pass
    return 1


def _pick_tm(M, *, max_rows=512, n_cores=1):
    """Rows per grid step.

    Small batch on a 1-TC chip -> single grid step (per-step overhead ~0.35us
    dominates this tiny kernel).  On 2-TC chips keep the step count a multiple
    of the core count so both TensorCores get balanced work.
    """
    steps = max(n_cores, pl.cdiv(M, max_rows))
    steps = pl.cdiv(steps, n_cores) * n_cores       # balanced across cores
    tm = pl.cdiv(M, steps)
    tm = max(8, pl.cdiv(tm, 8) * 8)                 # sublane-aligned
    return tm


# ----------------------------------------------------------------------------
# Wrapper
# ----------------------------------------------------------------------------
def ode_func_forward(params, t, z, *, max_rows_per_step=512):
    """ODEFunc.forward(t, z).  z: (M, dim) -> (M, dim).  t is unused."""
    del t  # matches PyTorch: ODEFunc.forward ignores t
    M, dim = z.shape
    hidden = params["w1"].shape[1]
    assert params["w1"].shape == (dim, hidden)
    assert params["w2"].shape == (hidden, dim)

    tm = _pick_tm(M, max_rows=max_rows_per_step, n_cores=_num_tensorcores())
    grid = (pl.cdiv(M, tm),)   # ragged last block is masked by Pallas

    # Advisory cost so XLA can overlap this tiny custom call with solver work.
    cost = pl.CostEstimate(
        flops=4 * M * dim * hidden,                 # two matmuls
        transcendentals=0,
        bytes_accessed=(M * dim * 4                 # z (f32 in)
                        + M * dim * 4               # out (f32)
                        + dim * hidden * 2 * 2      # W1 + W2 (bf16)
                        + (hidden + dim) * 4),      # biases (f32)
    )

    return pl.pallas_call(
        _odefunc_kernel,
        out_shape=jax.ShapeDtypeStruct((M, dim), jnp.float32),
        grid=grid,
        in_specs=[
            pl.BlockSpec((tm, dim), lambda i: (i, 0)),        # z tile (f32)
            pl.BlockSpec((dim, hidden), lambda i: (0, 0)),    # W1 (resident)
            pl.BlockSpec((1, hidden), lambda i: (0, 0)),      # b1
            pl.BlockSpec((hidden, dim), lambda i: (0, 0)),    # W2 (resident)
            pl.BlockSpec((1, dim), lambda i: (0, 0)),         # b2
        ],
        out_specs=pl.BlockSpec((tm, dim), lambda i: (i, 0)),
        compiler_params=pltpu.CompilerParams(
            dimension_semantics=("parallel",)),
        cost_estimate=cost,
    )(z, params["w1"], params["b1"], params["w2"], params["b2"])


# ----------------------------------------------------------------------------
# Parameter construction: weights stored once in kernel-ready (K, N) bf16 layout
# ----------------------------------------------------------------------------
def init_ode_func_params(key, dim):
    hidden = 2 * dim
    k1, k2, k3, k4 = jax.random.split(key, 4)
    s = 0.05
    # f32 "master" weights (used for the reference check); kernel uses bf16.
    w1 = s * jax.random.normal(k1, (dim, hidden), jnp.float32)    # (in, out)
    b1 = s * jax.random.normal(k2, (hidden,), jnp.float32)
    w2 = s * jax.random.normal(k3, (hidden, dim), jnp.float32)    # (in, out)
    b2 = s * jax.random.normal(k4, (dim,), jnp.float32)
    params = {
        "w1": w1.astype(jnp.bfloat16),
        "b1": b1.reshape(1, hidden),
        "w2": w2.astype(jnp.bfloat16),
        "b2": b2.reshape(1, dim),
    }
    master = {"w1": w1, "b1": b1, "w2": w2, "b2": b2}
    return params, master


def ode_func_reference(master, z):
    h = jnp.maximum(z @ master["w1"] + master["b1"], 0.0)
    return h @ master["w2"] + master["b2"]


if __name__ == "__main__":
    # dim=128 (lane-dense last dim), hidden=2*dim=256, batch=512.
    # On 1-TC chips this lowers to a single grid step; on v7x it splits evenly.
    dim = 128
    batch = 512

    key = jax.random.PRNGKey(0)
    kp, kz = jax.random.split(key)
    params, master = init_ode_func_params(kp, dim)
    z = jax.random.normal(kz, (batch, dim), dtype=jnp.float32)
    t = jnp.float32(0.0)   # unused, mirrors ODEFunc.forward signature

    fwd = jax.jit(functools.partial(ode_func_forward, params))
    y = fwd(t, z)
    y = jax.block_until_ready(y)

    assert y.shape == (batch, dim), y.shape
    assert bool(jnp.all(jnp.isfinite(y)))

    # Correctness vs. f32 reference (loose tolerance for bf16 MXU operands).
    ref = ode_func_reference(master, z)
    max_err = float(jnp.max(jnp.abs(y - ref)))
    assert max_err < 5e-2, f"max abs error {max_err}"

    print("KERNEL_OK")
</pallas_src>

<mosaic_0001>
module attributes {stable_mosaic.version = 11 : i64} {
  func.func @_odefunc_kernel(%arg0: i32, %arg1: memref<512x128xf32, #tpu.memory_space<vmem>>, %arg2: memref<128x256xbf16, #tpu.memory_space<vmem>>, %arg3: memref<1x256xf32, #tpu.memory_space<vmem>>, %arg4: memref<256x128xbf16, #tpu.memory_space<vmem>>, %arg5: memref<1x128xf32, #tpu.memory_space<vmem>>, %arg6: memref<512x128xf32, #tpu.memory_space<vmem>>) attributes {dimension_semantics = [#tpu.dimension_semantics<parallel>], iteration_bounds = array<i64: 1>, scalar_prefetch = 0 : i64, scratch_operands = 0 : i64, tpu.core_type = #tpu.core_type<tc>, window_params = [{transform_indices = @transform_0, window_bounds = array<i64: 512, 128>}, {pipeline_mode = #tpu.pipeline_mode<synchronous>, transform_indices = @transform_1, window_bounds = array<i64: 128, 256>}, {pipeline_mode = #tpu.pipeline_mode<synchronous>, transform_indices = @transform_2, window_bounds = array<i64: 1, 256>}, {pipeline_mode = #tpu.pipeline_mode<synchronous>, transform_indices = @transform_3, window_bounds = array<i64: 256, 128>}, {pipeline_mode = #tpu.pipeline_mode<synchronous>, transform_indices = @transform_4, window_bounds = array<i64: 1, 128>}, {transform_indices = @transform_5, window_bounds = array<i64: 512, 128>}]} {
    %c0 = arith.constant 0 : index
    %c0_0 = arith.constant 0 : index
    %0 = vector.load %arg1[%c0, %c0_0] : memref<512x128xf32, #tpu.memory_space<vmem>>, vector<512x128xf32>
    %1 = arith.truncf %0 : vector<512x128xf32> to vector<512x128xbf16>
    %c0_1 = arith.constant 0 : index
    %c0_2 = arith.constant 0 : index
    %2 = vector.load %arg2[%c0_1, %c0_2] : memref<128x256xbf16, #tpu.memory_space<vmem>>, vector<128x256xbf16>
    %cst = arith.constant dense<0.000000e+00> : vector<512x256xf32>
    %3 = tpu.matmul %1, %2, %cst {dimension_numbers = #tpu.dot_dimension_numbers<[1], [0], [0], [1], [0, 0, 1, 1], [], []>} : vector<512x128xbf16>, vector<128x256xbf16>, vector<512x256xf32> -> vector<512x256xf32>
    %c0_3 = arith.constant 0 : index
    %c0_4 = arith.constant 0 : index
    %4 = vector.load %arg3[%c0_3, %c0_4] : memref<1x256xf32, #tpu.memory_space<vmem>>, vector<1x256xf32>
    %5 = vector.broadcast %4 : vector<1x256xf32> to vector<512x256xf32>
    %6 = arith.addf %3, %5 : vector<512x256xf32>
    %cst_5 = arith.constant 0.000000e+00 : f32
    %7 = vector.broadcast %cst_5 : f32 to vector<512x256xf32>
    %8 = arith.maximumf %6, %7 : vector<512x256xf32>
    %9 = arith.truncf %8 : vector<512x256xf32> to vector<512x256xbf16>
    %c0_6 = arith.constant 0 : index
    %c0_7 = arith.constant 0 : index
    %10 = vector.load %arg4[%c0_6, %c0_7] : memref<256x128xbf16, #tpu.memory_space<vmem>>, vector<256x128xbf16>
    %cst_8 = arith.constant dense<0.000000e+00> : vector<512x128xf32>
    %11 = tpu.matmul %9, %10, %cst_8 {dimension_numbers = #tpu.dot_dimension_numbers<[1], [0], [0], [1], [0, 0, 1, 1], [], []>} : vector<512x256xbf16>, vector<256x128xbf16>, vector<512x128xf32> -> vector<512x128xf32>
    %c0_9 = arith.constant 0 : index
    %c0_10 = arith.constant 0 : index
    %12 = vector.load %arg5[%c0_9, %c0_10] : memref<1x128xf32, #tpu.memory_space<vmem>>, vector<1x128xf32>
    %13 = vector.broadcast %12 : vector<1x128xf32> to vector<512x128xf32>
    %14 = arith.addf %11, %13 : vector<512x128xf32>
    %c0_11 = arith.constant 0 : index
    %c0_12 = arith.constant 0 : index
    %15 = vector.load %arg6[%c0_11, %c0_12] : memref<512x128xf32, #tpu.memory_space<vmem>>, vector<512x128xf32>
    tpu.vector_store %arg6[%c0_11, %c0_12], %14 {strides = array<i32>} : memref<512x128xf32, #tpu.memory_space<vmem>>, vector<512x128xf32>,
    return
  }
  func.func @transform_0(%arg0: i32) -> (i32, i32) {
    %c0_i32 = arith.constant 0 : i32
    %c0_i32_0 = arith.constant 0 : i32
    return %arg0, %c0_i32 : i32, i32
  }
  func.func @transform_1(%arg0: i32) -> (i32, i32) {
    %c0_i32 = arith.constant 0 : i32
    %c0_i32_0 = arith.constant 0 : i32
    %c0_i32_1 = arith.constant 0 : i32
    return %c0_i32, %c0_i32_0 : i32, i32
  }
  func.func @transform_2(%arg0: i32) -> (i32, i32) {
    %c0_i32 = arith.constant 0 : i32
    %c0_i32_0 = arith.constant 0 : i32
    %c0_i32_1 = arith.constant 0 : i32
    return %c0_i32, %c0_i32_0 : i32, i32
  }
  func.func @transform_3(%arg0: i32) -> (i32, i32) {
    %c0_i32 = arith.constant 0 : i32
    %c0_i32_0 = arith.constant 0 : i32
    %c0_i32_1 = arith.constant 0 : i32
    return %c0_i32, %c0_i32_0 : i32, i32
  }
  func.func @transform_4(%arg0: i32) -> (i32, i32) {
    %c0_i32 = arith.constant 0 : i32
    %c0_i32_0 = arith.constant 0 : i32
    %c0_i32_1 = arith.constant 0 : i32
    return %c0_i32, %c0_i32_0 : i32, i32
  }
  func.func @transform_5(%arg0: i32) -> (i32, i32) {
    %c0_i32 = arith.constant 0 : i32
    %c0_i32_0 = arith.constant 0 : i32
    return %arg0, %c0_i32 : i32, i32
  }
}

</mosaic_0001>

<llo_original>
// kernel: ode_func_forward.1
$region0: #{ode_func_forward.1}
  #allocation0 [shape = 'u32[]', space=smem, size = 0x4, offset = 0x4, fixed_abs, tag = 'smem constant byte address 0x4 - core index']
  #allocation1 [shape = 'u32[144,128]{1,0:T(1,128)}', space=vmem, size = 0x12000, scoped, tag = 'internal scratch']
  %s0 = inlined_call_operand.hbm [shape: f32[512,128], index: 0, kind: input, shape index: {}]
  %s1 = inlined_call_operand.vmem [shape: bf16[128,256], index: 1, kind: input, shape index: {}]
  %s2 = inlined_call_operand.vmem [shape: f32[1,256], index: 2, kind: input, shape index: {}]
  %s3 = inlined_call_operand.vmem [shape: bf16[256,128], index: 3, kind: input, shape index: {}]
  %s4 = inlined_call_operand.vmem [shape: f32[1,128], index: 4, kind: input, shape index: {}]
  %s5 = inlined_call_operand.hbm [shape: f32[512,128], index: 5, kind: output, shape index: {}]
  %s6 = sld [smem:[#allocation0]]
  $region34: #{ode_func_forward.1} parent=0
    _
  %s8 = ssub.s32 1, %s6
  %s9 = scalar_select 0, %s8, %s6
  $region1: #{ode_func_forward.1} parent=0
    #allocation2 [shape = 'u8[262144]{0}', space=vmem, size = 0x40000, scoped, tag = 'input window, operand 0, single buffered']
    #allocation3 [shape = 's32[1]{0}', space=sflag, size = 0x4, scoped, tag = 'scoped memory for ode_func_forward.1']
    #allocation4 [shape = 's32[1]{0}', space=sflag, size = 0x4, scoped, tag = 'scoped memory for ode_func_forward.1']
    #allocation5 [shape = 'u8[262144]{0}', space=vmem, size = 0x40000, scoped, tag = 'output window, operand 0, single buffered']
    %10 = vsyncpa [#allocation3], 0
    %11 = vsyncpa [#allocation4], 0
    // Predicated region
    $region2: #{ode_func_forward.1} parent=1 // pred_check
      _
    $region3: #{ode_func_forward.1} parent=1 // pred_check_branch
      %13 = sbr.rel (0) target = $region5
    $region4: #{ode_func_forward.1} parent=1 // pred_region
      %s15 = ssub.s32 8192, 8192
      %16 = vsyncadd [#allocation3], %s15
      %s17 = sshll.u32 [#allocation2], 4
      %s18 = int_to_ptr.vmem [resolvable:$true] %s17
      %23 = dma.hbm_to_vmem [thread:$0]  %s0, 8192, %s18, [#allocation3], 128, 128, 8
    $region5: #{ode_func_forward.1} parent=1 // pred_fallthru
      _
    // Predicated region
    $region6: #{ode_func_forward.1} parent=1 // pred_check
      _
    $region7: #{ode_func_forward.1} parent=1 // pred_check_branch
      %25 = sbr.rel (0) target = $region9
    $region8: #{ode_func_forward.1} parent=1 // pred_region
      _
    $region9: #{ode_func_forward.1} parent=1 // pred_fallthru
      _
    // Predicated region
    $region10: #{ode_func_forward.1} parent=1 // pred_check
      _
    $region11: #{ode_func_forward.1} parent=1 // pred_check_branch
      %27 = sbr.rel (0) target = $region13
    $region12: #{ode_func_forward.1} parent=1 // pred_region
      _
    $region13: #{ode_func_forward.1} parent=1 // pred_fallthru
      _
    // Predicated region
    $region14: #{ode_func_forward.1} parent=1 // pred_check
      _
    $region15: #{ode_func_forward.1} parent=1 // pred_check_branch
      %29 = sbr.rel (0) target = $region17
    $region16: #{ode_func_forward.1} parent=1 // pred_region
      _
    $region17: #{ode_func_forward.1} parent=1 // pred_fallthru
      _
    // Predicated region
    $region18: #{ode_func_forward.1} parent=1 // pred_check
      _
    $region19: #{ode_func_forward.1} parent=1 // pred_check_branch
      %31 = sbr.rel (0) target = $region21
    $region20: #{ode_func_forward.1} parent=1 // pred_region
      _
    $region21: #{ode_func_forward.1} parent=1 // pred_fallthru
      _
    // Predicated region
    $region22: #{ode_func_forward.1} parent=1 // pred_check
      _
    $region23: #{ode_func_forward.1} parent=1 // pred_check_branch
      %33 = sbr.rel (0) target = $region25
    $region24: #{ode_func_forward.1} parent=1 // pred_region
      %34 = dma.done [#allocation3], 8192
    $region25: #{ode_func_forward.1} parent=1 // pred_fallthru
      _
    %v36 = vld [vmem:[#allocation2] sm:$0xff]
    %v37 = vld [vmem:[#allocation2 + $0x8] sm:$0xff]
    %v38 = vld [vmem:[#allocation2 + $0x10] sm:$0xff]
    %v39 = vld [vmem:[#allocation2 + $0x18] sm:$0xff]
    %v40 = vld [vmem:[#allocation2 + $0x20] sm:$0xff]
    %v41 = vld [vmem:[#allocation2 + $0x28] sm:$0xff]
    %v42 = vld [vmem:[#allocation2 + $0x30] sm:$0xff]
    %v43 = vld [vmem:[#allocation2 + $0x38] sm:$0xff]
    %v44 = vld [vmem:[#allocation2 + $0x40] sm:$0xff]
    %v45 = vld [vmem:[#allocation2 + $0x48] sm:$0xff]
    %v46 = vld [vmem:[#allocation2 + $0x50] sm:$0xff]
    %v47 = vld [vmem:[#allocation2 + $0x58] sm:$0xff]
    %v48 = vld [vmem:[#allocation2 + $0x60] sm:$0xff]
    %v49 = vld [vmem:[#allocation2 + $0x68] sm:$0xff]
    %v50 = vld [vmem:[#allocation2 + $0x70] sm:$0xff]
    %v51 = vld [vmem:[#allocation2 + $0x78] sm:$0xff]
    %v52 = vld [vmem:[#allocation2 + $0x80] sm:$0xff]
    %v53 = vld [vmem:[#allocation2 + $0x88] sm:$0xff]
    %v54 = vld [vmem:[#allocation2 + $0x90] sm:$0xff]
    %v55 = vld [vmem:[#allocation2 + $0x98] sm:$0xff]
    %v56 = vld [vmem:[#allocation2 + $0xa0] sm:$0xff]
    %v57 = vld [vmem:[#allocation2 + $0xa8] sm:$0xff]
    %v58 = vld [vmem:[#allocation2 + $0xb0] sm:$0xff]
    %v59 = vld [vmem:[#allocation2 + $0xb8] sm:$0xff]
    %v60 = vld [vmem:[#allocation2 + $0xc0] sm:$0xff]
    %v61 = vld [vmem:[#allocation2 + $0xc8] sm:$0xff]
    %v62 = vld [vmem:[#allocation2 + $0xd0] sm:$0xff]
    %v63 = vld [vmem:[#allocation2 + $0xd8] sm:$0xff]
    %v64 = vld [vmem:[#allocation2 + $0xe0] sm:$0xff]
    %v65 = vld [vmem:[#allocation2 + $0xe8] sm:$0xff]
    %v66 = vld [vmem:[#allocation2 + $0xf0] sm:$0xff]
    %v67 = vld [vmem:[#allocation2 + $0xf8] sm:$0xff]
    %v68 = vld [vmem:[#allocation2 + $0x100] sm:$0xff]
    %v69 = vld [vmem:[#allocation2 + $0x108] sm:$0xff]
    %v70 = vld [vmem:[#allocation2 + $0x110] sm:$0xff]
    %v71 = vld [vmem:[#allocation2 + $0x118] sm:$0xff]
    %v72 = vld [vmem:[#allocation2 + $0x120] sm:$0xff]
    %v73 = vld [vmem:[#allocation2 + $0x128] sm:$0xff]
    %v74 = vld [vmem:[#allocation2 + $0x130] sm:$0xff]
    %v75 = vld [vmem:[#allocation2 + $0x138] sm:$0xff]
    %v76 = vld [vmem:[#allocation2 + $0x140] sm:$0xff]
    %v77 = vld [vmem:[#allocation2 + $0x148] sm:$0xff]
    %v78 = vld [vmem:[#allocation2 + $0x150] sm:$0xff]
    %v79 = vld [vmem:[#allocation2 + $0x158] sm:$0xff]
    %v80 = vld [vmem:[#allocation2 + $0x160] sm:$0xff]
    %v81 = vld [vmem:[#allocation2 + $0x168] sm:$0xff]
    %v82 = vld [vmem:[#allocation2 + $0x170] sm:$0xff]
    %v83 = vld [vmem:[#allocation2 + $0x178] sm:$0xff]
    %v84 = vld [vmem:[#allocation2 + $0x180] sm:$0xff]
    %v85 = vld [vmem:[#allocation2 + $0x188] sm:$0xff]
    %v86 = vld [vmem:[#allocation2 + $0x190] sm:$0xff]
    %v87 = vld [vmem:[#allocation2 + $0x198] sm:$0xff]
    %v88 = vld [vmem:[#allocation2 + $0x1a0] sm:$0xff]
    %v89 = vld [vmem:[#allocation2 + $0x1a8] sm:$0xff]
    %v90 = vld [vmem:[#allocation2 + $0x1b0] sm:$0xff]
    %v91 = vld [vmem:[#allocation2 + $0x1b8] sm:$0xff]
    %v92 = vld [vmem:[#allocation2 + $0x1c0] sm:$0xff]
    %v93 = vld [vmem:[#allocation2 + $0x1c8] sm:$0xff]
    %v94 = vld [vmem:[#allocation2 + $0x1d0] sm:$0xff]
    %v95 = vld [vmem:[#allocation2 + $0x1d8] sm:$0xff]
    %v96 = vld [vmem:[#allocation2 + $0x1e0] sm:$0xff]
    %v97 = vld [vmem:[#allocation2 + $0x1e8] sm:$0xff]
    %v98 = vld [vmem:[#allocation2 + $0x1f0] sm:$0xff]
    %v99 = vld [vmem:[#allocation2 + $0x1f8] sm:$0xff]
    %v100 = vpack.c.bf16 %v37, %v36
    %v101 = vpack.c.bf16 %v39, %v38
    %v102 = vpack.c.bf16 %v41, %v40
    %v103 = vpack.c.bf16 %v43, %v42
    %v104 = vpack.c.bf16 %v45, %v44
    %v105 = vpack.c.bf16 %v47, %v46
    %v106 = vpack.c.bf16 %v49, %v48
    %v107 = vpack.c.bf16 %v51, %v50
    %v108 = vpack.c.bf16 %v53, %v52
    %v109 = vpack.c.bf16 %v55, %v54
    %v110 = vpack.c.bf16 %v57, %v56
    %v111 = vpack.c.bf16 %v59, %v58
    %v112 = vpack.c.bf16 %v61, %v60
    %v113 = vpack.c.bf16 %v63, %v62
    %v114 = vpack.c.bf16 %v65, %v64
    %v115 = vpack.c.bf16 %v67, %v66
    %v116 = vpack.c.bf16 %v69, %v68
    %v117 = vpack.c.bf16 %v71, %v70
    %v118 = vpack.c.bf16 %v73, %v72
    %v119 = vpack.c.bf16 %v75, %v74
    %v120 = vpack.c.bf16 %v77, %v76
    %v121 = vpack.c.bf16 %v79, %v78
    %v122 = vpack.c.bf16 %v81, %v80
    %v123 = vpack.c.bf16 %v83, %v82
    %v124 = vpack.c.bf16 %v85, %v84
    %v125 = vpack.c.bf16 %v87, %v86
    %v126 = vpack.c.bf16 %v89, %v88
    %v127 = vpack.c.bf16 %v91, %v90
    %v128 = vpack.c.bf16 %v93, %v92
    %v129 = vpack.c.bf16 %v95, %v94
    %v130 = vpack.c.bf16 %v97, %v96
    %v131 = vpack.c.bf16 %v99, %v98
    %v132 = vld [vmem:[%s1] sm:$0xff]
    %v133 = vld [vmem:[%s1 + $0x8] sm:$0xff]
    %v134 = vld [vmem:[%s1 + $0x10] sm:$0xff]
    %v135 = vld [vmem:[%s1 + $0x18] sm:$0xff]
    %v136 = vld [vmem:[%s1 + $0x20] sm:$0xff]
    %v137 = vld [vmem:[%s1 + $0x28] sm:$0xff]
    %v138 = vld [vmem:[%s1 + $0x30] sm:$0xff]
    %v139 = vld [vmem:[%s1 + $0x38] sm:$0xff]
    %v140 = vld [vmem:[%s1 + $0x40] sm:$0xff]
    %v141 = vld [vmem:[%s1 + $0x48] sm:$0xff]
    %v142 = vld [vmem:[%s1 + $0x50] sm:$0xff]
    %v143 = vld [vmem:[%s1 + $0x58] sm:$0xff]
    %v144 = vld [vmem:[%s1 + $0x60] sm:$0xff]
    %v145 = vld [vmem:[%s1 + $0x68] sm:$0xff]
    %v146 = vld [vmem:[%s1 + $0x70] sm:$0xff]
    %v147 = vld [vmem:[%s1 + $0x78] sm:$0xff]
    %v148 = vld [vmem:[%s2] sm:$0x3]
    %v150 = vlaneseq
    %v151 = vshrl.u32 %v150, 7
    %v152 = vsub.s32 0, %v151
    %v153 = vrot.slane %v148, %v152
    %v154 = vlaneseq
    %v155 = vshrl.u32 %v154, 7
    %v156 = vsub.s32 1, %v155
    %v157 = vrot.slane %v148, %v156
    %v176 = vunpack.c.l.b16 %v132
    %v177 = vunpack.c.h.b16 %v132
    %v178 = vunpack.c.l.b16 %v133
    %v179 = vunpack.c.h.b16 %v133
    %v180 = vunpack.c.l.b16 %v134
    %v181 = vunpack.c.h.b16 %v134
    %v182 = vunpack.c.l.b16 %v135
    %v183 = vunpack.c.h.b16 %v135
    %v184 = vunpack.c.l.b16 %v136
    %v185 = vunpack.c.h.b16 %v136
    %v186 = vunpack.c.l.b16 %v137
    %v187 = vunpack.c.h.b16 %v137
    %v188 = vunpack.c.l.b16 %v138
    %v189 = vunpack.c.h.b16 %v138
    %v190 = vunpack.c.l.b16 %v139
    %v191 = vunpack.c.h.b16 %v139
    %v192 = vunpack.c.l.b16 %v140
    %v193 = vunpack.c.h.b16 %v140
    %v194 = vunpack.c.l.b16 %v141
    %v195 = vunpack.c.h.b16 %v141
    %v196 = vunpack.c.l.b16 %v142
    %v197 = vunpack.c.h.b16 %v142
    %v198 = vunpack.c.l.b16 %v143
    %v199 = vunpack.c.h.b16 %v143
    %v200 = vunpack.c.l.b16 %v144
    %v201 = vunpack.c.h.b16 %v144
    %v202 = vunpack.c.l.b16 %v145
    %v203 = vunpack.c.h.b16 %v145
    %v204 = vunpack.c.l.b16 %v146
    %v205 = vunpack.c.h.b16 %v146
    %v206 = vunpack.c.l.b16 %v147
    %v207 = vunpack.c.h.b16 %v147
    %v208 = vpack.c.b16 %v178, %v176
    %v209 = vpack.c.b16 %v179, %v177
    %v210 = vpack.c.b16 %v182, %v180
    %v211 = vpack.c.b16 %v183, %v181
    %v212 = vpack.c.b16 %v186, %v184
    %v213 = vpack.c.b16 %v187, %v185
    %v214 = vpack.c.b16 %v190, %v188
    %v215 = vpack.c.b16 %v191, %v189
    %v216 = vpack.c.b16 %v194, %v192
    %v217 = vpack.c.b16 %v195, %v193
    %v218 = vpack.c.b16 %v198, %v196
    %v219 = vpack.c.b16 %v199, %v197
    %v220 = vpack.c.b16 %v202, %v200
    %v221 = vpack.c.b16 %v203, %v201
    %v222 = vpack.c.b16 %v206, %v204
    %v223 = vpack.c.b16 %v207, %v205
    %240 = vmatprep.subr.bf16.mxu0 %v209
    %241 = vmatpush1.bf16.msra.mxu0 %v208
    %242 = vmatprep.subr.bf16.mxu0 %v211
    %243 = vmatpush1.bf16.msra.mxu0 %v210
    %244 = vmatprep.subr.bf16.mxu0 %v213
    %245 = vmatpush1.bf16.msra.mxu0 %v212
    %246 = vmatprep.subr.bf16.mxu0 %v215
    %247 = vmatpush1.bf16.msra.mxu0 %v214
    %248 = vmatprep.subr.bf16.mxu0 %v217
    %249 = vmatpush1.bf16.msra.mxu0 %v216
    %250 = vmatprep.subr.bf16.mxu0 %v219
    %251 = vmatpush1.bf16.msra.mxu0 %v218
    %252 = vmatprep.subr.bf16.mxu0 %v221
    %253 = vmatpush1.bf16.msra.mxu0 %v220
    %254 = vmatprep.subr.bf16.mxu0 %v223
    %255 = vmatpush1.bf16.msra.mxu0 %v222
    %256 = vmatprep.subr.bf16.mxu0 0
    %257 = vmatpush1.bf16.msra.mxu0 0
    %258 = vmatprep.subr.bf16.mxu0 0
    %259 = vmatpush1.bf16.msra.mxu0 0
    %260 = vmatprep.subr.bf16.mxu0 0
    %261 = vmatpush1.bf16.msra.mxu0 0
    %262 = vmatprep.subr.bf16.mxu0 0
    %263 = vmatpush1.bf16.msra.mxu0 0
    %264 = vmatprep.subr.bf16.mxu0 0
    %265 = vmatpush1.bf16.msra.mxu0 0
    %266 = vmatprep.subr.bf16.mxu0 0
    %267 = vmatpush1.bf16.msra.mxu0 0
    %268 = vmatprep.subr.bf16.mxu0 0
    %269 = vmatpush1.bf16.msra.mxu0 0
    %270 = vmatprep.subr.bf16.mxu0 0
    %271 = vmatpush1.bf16.msra.mxu0 0
    %272 = vmatprep.mubr.bf16.mxu0 0
    %273 = vmatmul.mubr.bf16.gmra.mrb[0].mxu0 %v100
    %v274 = vpop.f32.mrb[0].mxu0
    %v275 = vadd.f32 %v153, %v274
    %v276 = vpop.f32.mrb[0].mxu0
    %v277 = vadd.f32 %v157, %v276
    %v278 = vpop.f32.mrb[0].mxu0
    %v279 = vadd.f32 %v153, %v278
    %v280 = vpop.f32.mrb[0].mxu0
    %v281 = vadd.f32 %v157, %v280
    %282 = vmatprep.mubr.bf16.mxu0 0
    %283 = vmatmul.mubr.bf16.gmra.mrb[0].mxu0 %v101
    %v284 = vpop.f32.mrb[0].mxu0
    %v285 = vadd.f32 %v153, %v284
    %v286 = vpop.f32.mrb[0].mxu0
    %v287 = vadd.f32 %v157, %v286
    %v288 = vpop.f32.mrb[0].mxu0
    %v289 = vadd.f32 %v153, %v288
    %v290 = vpop.f32.mrb[0].mxu0
    %v291 = vadd.f32 %v157, %v290
    %292 = vmatprep.mubr.bf16.mxu0 0
    %293 = vmatmul.mubr.bf16.gmra.mrb[0].mxu0 %v102
    %v294 = vpop.f32.mrb[0].mxu0
    %v295 = vadd.f32 %v153, %v294
    %v296 = vpop.f32.mrb[0].mxu0
    %v297 = vadd.f32 %v157, %v296
    %v298 = vpop.f32.mrb[0].mxu0
    %v299 = vadd.f32 %v153, %v298
    %v300 = vpop.f32.mrb[0].mxu0
    %v301 = vadd.f32 %v157, %v300
    %302 = vmatprep.mubr.bf16.mxu0 0
    %303 = vmatmul.mubr.bf16.gmra.mrb[0].mxu0 %v103
    %v304 = vpop.f32.mrb[0].mxu0
    %v305 = vadd.f32 %v153, %v304
    %v306 = vpop.f32.mrb[0].mxu0
    %v307 = vadd.f32 %v157, %v306
    %v308 = vpop.f32.mrb[0].mxu0
    %v309 = vadd.f32 %v153, %v308
    %v310 = vpop.f32.mrb[0].mxu0
    %v311 = vadd.f32 %v157, %v310
    %312 = vmatprep.mubr.bf16.mxu0 0
    %313 = vmatmul.mubr.bf16.gmra.mrb[0].mxu0 %v104
    %v314 = vpop.f32.mrb[0].mxu0
    %v315 = vadd.f32 %v153, %v314
    %v316 = vpop.f32.mrb[0].mxu0
    %v317 = vadd.f32 %v157, %v316
    %v318 = vpop.f32.mrb[0].mxu0
    %v319 = vadd.f32 %v153, %v318
    %v320 = vpop.f32.mrb[0].mxu0
    %v321 = vadd.f32 %v157, %v320
    %322 = vmatprep.mubr.bf16.mxu0 0
    %323 = vmatmul.mubr.bf16.gmra.mrb[0].mxu0 %v105
    %v324 = vpop.f32.mrb[0].mxu0
    %v325 = vadd.f32 %v153, %v324
    %v326 = vpop.f32.mrb[0].mxu0
    %v327 = vadd.f32 %v157, %v326
    %v328 = vpop.f32.mrb[0].mxu0
    %v329 = vadd.f32 %v153, %v328
    %v330 = vpop.f32.mrb[0].mxu0
    %v331 = vadd.f32 %v157, %v330
    %332 = vmatprep.mubr.bf16.mxu0 0
    %333 = vmatmul.mubr.bf16.gmra.mrb[0].mxu0 %v106
    %v334 = vpop.f32.mrb[0].mxu0
    %v335 = vadd.f32 %v153, %v334
    %v336 = vpop.f32.mrb[0].mxu0
    %v337 = vadd.f32 %v157, %v336
    %v338 = vpop.f32.mrb[0].mxu0
    %v339 = vadd.f32 %v153, %v338
    %v340 = vpop.f32.mrb[0].mxu0
    %v341 = vadd.f32 %v157, %v340
    %342 = vmatprep.mubr.bf16.mxu0 0
    %343 = vmatmul.mubr.bf16.gmra.mrb[0].mxu0 %v107
    %v344 = vpop.f32.mrb[0].mxu0
    %v345 = vadd.f32 %v153, %v344
    %v346 = vpop.f32.mrb[0].mxu0
    %v347 = vadd.f32 %v157, %v346
    %v348 = vpop.f32.mrb[0].mxu0
    %v349 = vadd.f32 %v153, %v348
    %v350 = vpop.f32.mrb[0].mxu0
    %v351 = vadd.f32 %v157, %v350
    %352 = vmatprep.mubr.bf16.mxu0 0
    %353 = vmatmul.mubr.bf16.gmra.mrb[0].mxu0 %v108
    %v354 = vpop.f32.mrb[0].mxu0
    %v355 = vadd.f32 %v153, %v354
    %v356 = vpop.f32.mrb[0].mxu0
    %v357 = vadd.f32 %v157, %v356
    %v358 = vpop.f32.mrb[0].mxu0
    %v359 = vadd.f32 %v153, %v358
    %v360 = vpop.f32.mrb[0].mxu0
    %v361 = vadd.f32 %v157, %v360
    %362 = vmatprep.mubr.bf16.mxu0 0
    %363 = vmatmul.mubr.bf16.gmra.mrb[0].mxu0 %v109
    %v364 = vpop.f32.mrb[0].mxu0
    %v365 = vadd.f32 %v153, %v364
    %v366 = vpop.f32.mrb[0].mxu0
    %v367 = vadd.f32 %v157, %v366
    %v368 = vpop.f32.mrb[0].mxu0
    %v369 = vadd.f32 %v153, %v368
    %v370 = vpop.f32.mrb[0].mxu0
    %v371 = vadd.f32 %v157, %v370
    %372 = vmatprep.mubr.bf16.mxu0 0
    %373 = vmatmul.mubr.bf16.gmra.mrb[0].mxu0 %v110
    %v374 = vpop.f32.mrb[0].mxu0
    %v375 = vadd.f32 %v153, %v374
    %v376 = vpop.f32.mrb[0].mxu0
    %v377 = vadd.f32 %v157, %v376
    %v378 = vpop.f32.mrb[0].mxu0
    %v379 = vadd.f32 %v153, %v378
    %v380 = vpop.f32.mrb[0].mxu0
    %v381 = vadd.f32 %v157, %v380
    %382 = vmatprep.mubr.bf16.mxu0 0
    %383 = vmatmul.mubr.bf16.gmra.mrb[0].mxu0 %v111
    %v384 = vpop.f32.mrb[0].mxu0
    %v385 = vadd.f32 %v153, %v384
    %v386 = vpop.f32.mrb[0].mxu0
    %v387 = vadd.f32 %v157, %v386
    %v388 = vpop.f32.mrb[0].mxu0
    %v389 = vadd.f32 %v153, %v388
    %v390 = vpop.f32.mrb[0].mxu0
    %v391 = vadd.f32 %v157, %v390
    %392 = vmatprep.mubr.bf16.mxu0 0
    %393 = vmatmul.mubr.bf16.gmra.mrb[0].mxu0 %v112
    %v394 = vpop.f32.mrb[0].mxu0
    %v395 = vadd.f32 %v153, %v394
    %v396 = vpop.f32.mrb[0].mxu0
    %v397 = vadd.f32 %v157, %v396
    %v398 = vpop.f32.mrb[0].mxu0
    %v399 = vadd.f32 %v153, %v398
    %v400 = vpop.f32.mrb[0].mxu0
    %v401 = vadd.f32 %v157, %v400
    %402 = vmatprep.mubr.bf16.mxu0 0
    %403 = vmatmul.mubr.bf16.gmra.mrb[0].mxu0 %v113
    %v404 = vpop.f32.mrb[0].mxu0
    %v405 = vadd.f32 %v153, %v404
    %v406 = vpop.f32.mrb[0].mxu0
    %v407 = vadd.f32 %v157, %v406
    %v408 = vpop.f32.mrb[0].mxu0
    %v409 = vadd.f32 %v153, %v408
    %v410 = vpop.f32.mrb[0].mxu0
    %v411 = vadd.f32 %v157, %v410
    %412 = vmatprep.mubr.bf16.mxu0 0
    %413 = vmatmul.mubr.bf16.gmra.mrb[0].mxu0 %v114
    %v414 = vpop.f32.mrb[0].mxu0
    %v415 = vadd.f32 %v153, %v414
    %v416 = vpop.f32.mrb[0].mxu0
    %v417 = vadd.f32 %v157, %v416
    %v418 = vpop.f32.mrb[0].mxu0
    %v419 = vadd.f32 %v153, %v418
    %v420 = vpop.f32.mrb[0].mxu0
    %v421 = vadd.f32 %v157, %v420
    %422 = vmatprep.mubr.bf16.mxu0 0
    %423 = vmatmul.mubr.bf16.gmra.mrb[0].mxu0 %v115
    %v424 = vpop.f32.mrb[0].mxu0
    %v425 = vadd.f32 %v153, %v424
    %v426 = vpop.f32.mrb[0].mxu0
    %v427 = vadd.f32 %v157, %v426
    %v428 = vpop.f32.mrb[0].mxu0
    %v429 = vadd.f32 %v153, %v428
    %v430 = vpop.f32.mrb[0].mxu0
    %v431 = vadd.f32 %v157, %v430
    %432 = vmatprep.mubr.bf16.mxu0 0
    %433 = vmatmul.mubr.bf16.gmra.mrb[0].mxu0 %v116
    %v434 = vpop.f32.mrb[0].mxu0
    %v435 = vadd.f32 %v153, %v434
    %v436 = vpop.f32.mrb[0].mxu0
    %v437 = vadd.f32 %v157, %v436
    %v438 = vpop.f32.mrb[0].mxu0
    %v439 = vadd.f32 %v153, %v438
    %v440 = vpop.f32.mrb[0].mxu0
    %v441 = vadd.f32 %v157, %v440
    %442 = vmatprep.mubr.bf16.mxu0 0
    %443 = vmatmul.mubr.bf16.gmra.mrb[0].mxu0 %v117
    %v444 = vpop.f32.mrb[0].mxu0
    %v445 = vadd.f32 %v153, %v444
    %v446 = vpop.f32.mrb[0].mxu0
    %v447 = vadd.f32 %v157, %v446
    %v448 = vpop.f32.mrb[0].mxu0
    %v449 = vadd.f32 %v153, %v448
    %v450 = vpop.f32.mrb[0].mxu0
    %v451 = vadd.f32 %v157, %v450
    %452 = vmatprep.mubr.bf16.mxu0 0
    %453 = vmatmul.mubr.bf16.gmra.mrb[0].mxu0 %v118
    %v454 = vpop.f32.mrb[0].mxu0
    %v455 = vadd.f32 %v153, %v454
    %v456 = vpop.f32.mrb[0].mxu0
    %v457 = vadd.f32 %v157, %v456
    %v458 = vpop.f32.mrb[0].mxu0
    %v459 = vadd.f32 %v153, %v458
    %v460 = vpop.f32.mrb[0].mxu0
    %v461 = vadd.f32 %v157, %v460
    %462 = vmatprep.mubr.bf16.mxu0 0
    %463 = vmatmul.mubr.bf16.gmra.mrb[0].mxu0 %v119
    %v464 = vpop.f32.mrb[0].mxu0
    %v465 = vadd.f32 %v153, %v464
    %v466 = vpop.f32.mrb[0].mxu0
    %v467 = vadd.f32 %v157, %v466
    %v468 = vpop.f32.mrb[0].mxu0
    %v469 = vadd.f32 %v153, %v468
    %v470 = vpop.f32.mrb[0].mxu0
    %v471 = vadd.f32 %v157, %v470
    %472 = vmatprep.mubr.bf16.mxu0 0
    %473 = vmatmul.mubr.bf16.gmra.mrb[0].mxu0 %v120
    %v474 = vpop.f32.mrb[0].mxu0
    %v475 = vadd.f32 %v153, %v474
    %v476 = vpop.f32.mrb[0].mxu0
    %v477 = vadd.f32 %v157, %v476
    %v478 = vpop.f32.mrb[0].mxu0
    %v479 = vadd.f32 %v153, %v478
    %v480 = vpop.f32.mrb[0].mxu0
    %v481 = vadd.f32 %v157, %v480
    %482 = vmatprep.mubr.bf16.mxu0 0
    %483 = vmatmul.mubr.bf16.gmra.mrb[0].mxu0 %v121
    %v484 = vpop.f32.mrb[0].mxu0
    %v485 = vadd.f32 %v153, %v484
    %v486 = vpop.f32.mrb[0].mxu0
    %v487 = vadd.f32 %v157, %v486
    %v488 = vpop.f32.mrb[0].mxu0
    %v489 = vadd.f32 %v153, %v488
    %v490 = vpop.f32.mrb[0].mxu0
    %v491 = vadd.f32 %v157, %v490
    %492 = vmatprep.mubr.bf16.mxu0 0
    %493 = vmatmul.mubr.bf16.gmra.mrb[0].mxu0 %v122
    %v494 = vpop.f32.mrb[0].mxu0
    %v495 = vadd.f32 %v153, %v494
    %v496 = vpop.f32.mrb[0].mxu0
    %v497 = vadd.f32 %v157, %v496
    %v498 = vpop.f32.mrb[0].mxu0
    %v499 = vadd.f32 %v153, %v498
    %v500 = vpop.f32.mrb[0].mxu0
    %v501 = vadd.f32 %v157, %v500
    %502 = vmatprep.mubr.bf16.mxu0 0
    %503 = vmatmul.mubr.bf16.gmra.mrb[0].mxu0 %v123
    %v504 = vpop.f32.mrb[0].mxu0
    %v505 = vadd.f32 %v153, %v504
    %v506 = vpop.f32.mrb[0].mxu0
    %v507 = vadd.f32 %v157, %v506
    %v508 = vpop.f32.mrb[0].mxu0
    %v509 = vadd.f32 %v153, %v508
    %v510 = vpop.f32.mrb[0].mxu0
    %v511 = vadd.f32 %v157, %v510
    %512 = vmatprep.mubr.bf16.mxu0 0
    %513 = vmatmul.mubr.bf16.gmra.mrb[0].mxu0 %v124
    %v514 = vpop.f32.mrb[0].mxu0
    %v515 = vadd.f32 %v153, %v514
    %v516 = vpop.f32.mrb[0].mxu0
    %v517 = vadd.f32 %v157, %v516
    %v518 = vpop.f32.mrb[0].mxu0
    %v519 = vadd.f32 %v153, %v518
    %v520 = vpop.f32.mrb[0].mxu0
    %v521 = vadd.f32 %v157, %v520
    %522 = vmatprep.mubr.bf16.mxu0 0
    %523 = vmatmul.mubr.bf16.gmra.mrb[0].mxu0 %v125
    %v524 = vpop.f32.mrb[0].mxu0
    %v525 = vadd.f32 %v153, %v524
    %v526 = vpop.f32.mrb[0].mxu0
    %v527 = vadd.f32 %v157, %v526
    %v528 = vpop.f32.mrb[0].mxu0
    %v529 = vadd.f32 %v153, %v528
    %v530 = vpop.f32.mrb[0].mxu0
    %v531 = vadd.f32 %v157, %v530
    %532 = vmatprep.mubr.bf16.mxu0 0
    %533 = vmatmul.mubr.bf16.gmra.mrb[0].mxu0 %v126
    %v534 = vpop.f32.mrb[0].mxu0
    %v535 = vadd.f32 %v153, %v534
    %v536 = vpop.f32.mrb[0].mxu0
    %v537 = vadd.f32 %v157, %v536
    %v538 = vpop.f32.mrb[0].mxu0
    %v539 = vadd.f32 %v153, %v538
    %v540 = vpop.f32.mrb[0].mxu0
    %v541 = vadd.f32 %v157, %v540
    %542 = vmatprep.mubr.bf16.mxu0 0
    %543 = vmatmul.mubr.bf16.gmra.mrb[0].mxu0 %v127
    %v544 = vpop.f32.mrb[0].mxu0
    %v545 = vadd.f32 %v153, %v544
    %v546 = vpop.f32.mrb[0].mxu0
    %v547 = vadd.f32 %v157, %v546
    %v548 = vpop.f32.mrb[0].mxu0
    %v549 = vadd.f32 %v153, %v548
    %v550 = vpop.f32.mrb[0].mxu0
    %v551 = vadd.f32 %v157, %v550
    %552 = vmatprep.mubr.bf16.mxu0 0
    %553 = vmatmul.mubr.bf16.gmra.mrb[0].mxu0 %v128
    %v554 = vpop.f32.mrb[0].mxu0
    %v555 = vadd.f32 %v153, %v554
    %v556 = vpop.f32.mrb[0].mxu0
    %v557 = vadd.f32 %v157, %v556
    %v558 = vpop.f32.mrb[0].mxu0
    %v559 = vadd.f32 %v153, %v558
    %v560 = vpop.f32.mrb[0].mxu0
    %v561 = vadd.f32 %v157, %v560
    %562 = vmatprep.mubr.bf16.mxu0 0
    %563 = vmatmul.mubr.bf16.gmra.mrb[0].mxu0 %v129
    %v564 = vpop.f32.mrb[0].mxu0
    %v565 = vadd.f32 %v153, %v564
    %v566 = vpop.f32.mrb[0].mxu0
    %v567 = vadd.f32 %v157, %v566
    %v568 = vpop.f32.mrb[0].mxu0
    %v569 = vadd.f32 %v153, %v568
    %v570 = vpop.f32.mrb[0].mxu0
    %v571 = vadd.f32 %v157, %v570
    %572 = vmatprep.mubr.bf16.mxu0 0
    %573 = vmatmul.mubr.bf16.gmra.mrb[0].mxu0 %v130
    %v574 = vpop.f32.mrb[0].mxu0
    %v575 = vadd.f32 %v153, %v574
    %v576 = vpop.f32.mrb[0].mxu0
    %v577 = vadd.f32 %v157, %v576
    %v578 = vpop.f32.mrb[0].mxu0
    %v579 = vadd.f32 %v153, %v578
    %v580 = vpop.f32.mrb[0].mxu0
    %v581 = vadd.f32 %v157, %v580
    %582 = vmatprep.mubr.bf16.mxu0 0
    %583 = vmatmul.mubr.bf16.gmra.mrb[0].mxu0 %v131
    %v584 = vpop.f32.mrb[0].mxu0
    %v585 = vadd.f32 %v153, %v584
    %v586 = vpop.f32.mrb[0].mxu0
    %v587 = vadd.f32 %v157, %v586
    %v588 = vpop.f32.mrb[0].mxu0
    %v589 = vadd.f32 %v153, %v588
    %v590 = vpop.f32.mrb[0].mxu0
    %v591 = vadd.f32 %v157, %v590
    %592 = vdwg.mxu0
    %v593 = vmax.f32 %v275, 0.0
    %v594 = vmax.f32 %v277, 0.0
    %v595 = vmax.f32 %v279, 0.0
    %v596 = vmax.f32 %v281, 0.0
    %v597 = vmax.f32 %v285, 0.0
    %v598 = vmax.f32 %v287, 0.0
    %v599 = vmax.f32 %v289, 0.0
    %v600 = vmax.f32 %v291, 0.0
    %v601 = vmax.f32 %v295, 0.0
    %v602 = vmax.f32 %v297, 0.0
    %v603 = vmax.f32 %v299, 0.0
    %v604 = vmax.f32 %v301, 0.0
    %v605 = vmax.f32 %v305, 0.0
    %v606 = vmax.f32 %v307, 0.0
    %v607 = vmax.f32 %v309, 0.0
    %v608 = vmax.f32 %v311, 0.0
    %v609 = vmax.f32 %v315, 0.0
    %v610 = vmax.f32 %v317, 0.0
    %v611 = vmax.f32 %v319, 0.0
    %v612 = vmax.f32 %v321, 0.0
    %v613 = vmax.f32 %v325, 0.0
    %v614 = vmax.f32 %v327, 0.0
    %v615 = vmax.f32 %v329, 0.0
    %v616 = vmax.f32 %v331, 0.0
    %v617 = vmax.f32 %v335, 0.0
    %v618 = vmax.f32 %v337, 0.0
    %v619 = vmax.f32 %v339, 0.0
    %v620 = vmax.f32 %v341, 0.0
    %v621 = vmax.f32 %v345, 0.0
    %v622 = vmax.f32 %v347, 0.0
    %v623 = vmax.f32 %v349, 0.0
    %v624 = vmax.f32 %v351, 0.0
    %v625 = vmax.f32 %v355, 0.0
    %v626 = vmax.f32 %v357, 0.0
    %v627 = vmax.f32 %v359, 0.0
    %v628 = vmax.f32 %v361, 0.0
    %v629 = vmax.f32 %v365, 0.0
    %v630 = vmax.f32 %v367, 0.0
    %v631 = vmax.f32 %v369, 0.0
    %v632 = vmax.f32 %v371, 0.0
    %v633 = vmax.f32 %v375, 0.0
    %v634 = vmax.f32 %v377, 0.0
    %v635 = vmax.f32 %v379, 0.0
    %v636 = vmax.f32 %v381, 0.0
    %v637 = vmax.f32 %v385, 0.0
    %v638 = vmax.f32 %v387, 0.0
    %v639 = vmax.f32 %v389, 0.0
    %v640 = vmax.f32 %v391, 0.0
    %v641 = vmax.f32 %v395, 0.0
    %v642 = vmax.f32 %v397, 0.0
    %v643 = vmax.f32 %v399, 0.0
    %v644 = vmax.f32 %v401, 0.0
    %v645 = vmax.f32 %v405, 0.0
    %v646 = vmax.f32 %v407, 0.0
    %v647 = vmax.f32 %v409, 0.0
    %v648 = vmax.f32 %v411, 0.0
    %v649 = vmax.f32 %v415, 0.0
    %v650 = vmax.f32 %v417, 0.0
    %v651 = vmax.f32 %v419, 0.0
    %v652 = vmax.f32 %v421, 0.0
    %v653 = vmax.f32 %v425, 0.0
    %v654 = vmax.f32 %v427, 0.0
    %v655 = vmax.f32 %v429, 0.0
    %v656 = vmax.f32 %v431, 0.0
    %v657 = vmax.f32 %v435, 0.0
    %v658 = vmax.f32 %v437, 0.0
    %v659 = vmax.f32 %v439, 0.0
    %v660 = vmax.f32 %v441, 0.0
    %v661 = vmax.f32 %v445, 0.0
    %v662 = vmax.f32 %v447, 0.0
    %v663 = vmax.f32 %v449, 0.0
    %v664 = vmax.f32 %v451, 0.0
    %v665 = vmax.f32 %v455, 0.0
    %v666 = vmax.f32 %v457, 0.0
    %v667 = vmax.f32 %v459, 0.0
    %v668 = vmax.f32 %v461, 0.0
    %v669 = vmax.f32 %v465, 0.0
    %v670 = vmax.f32 %v467, 0.0
    %v671 = vmax.f32 %v469, 0.0
    %v672 = vmax.f32 %v471, 0.0
    %v673 = vmax.f32 %v475, 0.0
    %v674 = vmax.f32 %v477, 0.0
    %v675 = vmax.f32 %v479, 0.0
    %v676 = vmax.f32 %v481, 0.0
    %v677 = vmax.f32 %v485, 0.0
    %v678 = vmax.f32 %v487, 0.0
    %v679 = vmax.f32 %v489, 0.0
    %v680 = vmax.f32 %v491, 0.0
    %v681 = vmax.f32 %v495, 0.0
    %v682 = vmax.f32 %v497, 0.0
    %v683 = vmax.f32 %v499, 0.0
    %v684 = vmax.f32 %v501, 0.0
    %v685 = vmax.f32 %v505, 0.0
    %v686 = vmax.f32 %v507, 0.0
    %v687 = vmax.f32 %v509, 0.0
    %v688 = vmax.f32 %v511, 0.0
    %v689 = vmax.f32 %v515, 0.0
    %v690 = vmax.f32 %v517, 0.0
    %v691 = vmax.f32 %v519, 0.0
    %v692 = vmax.f32 %v521, 0.0
    %v693 = vmax.f32 %v525, 0.0
    %v694 = vmax.f32 %v527, 0.0
    %v695 = vmax.f32 %v529, 0.0
    %v696 = vmax.f32 %v531, 0.0
    %v697 = vmax.f32 %v535, 0.0
    %v698 = vmax.f32 %v537, 0.0
    %v699 = vmax.f32 %v539, 0.0
    %v700 = vmax.f32 %v541, 0.0
    %v701 = vmax.f32 %v545, 0.0
    %v702 = vmax.f32 %v547, 0.0
    %v703 = vmax.f32 %v549, 0.0
    %v704 = vmax.f32 %v551, 0.0
    %v705 = vmax.f32 %v555, 0.0
    %v706 = vmax.f32 %v557, 0.0
    %v707 = vmax.f32 %v559, 0.0
    %v708 = vmax.f32 %v561, 0.0
    %v709 = vmax.f32 %v565, 0.0
    %v710 = vmax.f32 %v567, 0.0
    %v711 = vmax.f32 %v569, 0.0
    %v712 = vmax.f32 %v571, 0.0
    %v713 = vmax.f32 %v575, 0.0
    %v714 = vmax.f32 %v577, 0.0
    %v715 = vmax.f32 %v579, 0.0
    %v716 = vmax.f32 %v581, 0.0
    %v717 = vmax.f32 %v585, 0.0
    %v718 = vmax.f32 %v587, 0.0
    %v719 = vmax.f32 %v589, 0.0
    %v720 = vmax.f32 %v591, 0.0
    %v721 = vpack.c.bf16 %v595, %v593
    %v722 = vpack.c.bf16 %v596, %v594
    %v723 = vpack.c.bf16 %v599, %v597
    %v724 = vpack.c.bf16 %v600, %v598
    %v725 = vpack.c.bf16 %v603, %v601
    %v726 = vpack.c.bf16 %v604, %v602
    %v727 = vpack.c.bf16 %v607, %v605
    %v728 = vpack.c.bf16 %v608, %v606
    %v729 = vpack.c.bf16 %v611, %v609
    %v730 = vpack.c.bf16 %v612, %v610
    %v731 = vpack.c.bf16 %v615, %v613
    %v732 = vpack.c.bf16 %v616, %v614
    %v733 = vpack.c.bf16 %v619, %v617
    %v734 = vpack.c.bf16 %v620, %v618
    %v735 = vpack.c.bf16 %v623, %v621
    %v736 = vpack.c.bf16 %v624, %v622
    %v737 = vpack.c.bf16 %v627, %v625
    %v738 = vpack.c.bf16 %v628, %v626
    %v739 = vpack.c.bf16 %v631, %v629
    %v740 = vpack.c.bf16 %v632, %v630
    %v741 = vpack.c.bf16 %v635, %v633
    %v742 = vpack.c.bf16 %v636, %v634
    %v743 = vpack.c.bf16 %v639, %v637
    %v744 = vpack.c.bf16 %v640, %v638
    %v745 = vpack.c.bf16 %v643, %v641
    %v746 = vpack.c.bf16 %v644, %v642
    %v747 = vpack.c.bf16 %v647, %v645
    %v748 = vpack.c.bf16 %v648, %v646
    %v749 = vpack.c.bf16 %v651, %v649
    %v750 = vpack.c.bf16 %v652, %v650
    %v751 = vpack.c.bf16 %v655, %v653
    %v752 = vpack.c.bf16 %v656, %v654
    %v753 = vpack.c.bf16 %v659, %v657
    %v754 = vpack.c.bf16 %v660, %v658
    %v755 = vpack.c.bf16 %v663, %v661
    %v756 = vpack.c.bf16 %v664, %v662
    %v757 = vpack.c.bf16 %v667, %v665
    %v758 = vpack.c.bf16 %v668, %v666
    %v759 = vpack.c.bf16 %v671, %v669
    %v760 = vpack.c.bf16 %v672, %v670
    %v761 = vpack.c.bf16 %v675, %v673
    %v762 = vpack.c.bf16 %v676, %v674
    %v763 = vpack.c.bf16 %v679, %v677
    %v764 = vpack.c.bf16 %v680, %v678
    %v765 = vpack.c.bf16 %v683, %v681
    %v766 = vpack.c.bf16 %v684, %v682
    %v767 = vpack.c.bf16 %v687, %v685
    %v768 = vpack.c.bf16 %v688, %v686
    %v769 = vpack.c.bf16 %v691, %v689
    %v770 = vpack.c.bf16 %v692, %v690
    %v771 = vpack.c.bf16 %v695, %v693
    %v772 = vpack.c.bf16 %v696, %v694
    %v773 = vpack.c.bf16 %v699, %v697
    %v774 = vpack.c.bf16 %v700, %v698
    %v775 = vpack.c.bf16 %v703, %v701
    %v776 = vpack.c.bf16 %v704, %v702
    %v777 = vpack.c.bf16 %v707, %v705
    %v778 = vpack.c.bf16 %v708, %v706
    %v779 = vpack.c.bf16 %v711, %v709
    %v780 = vpack.c.bf16 %v712, %v710
    %v781 = vpack.c.bf16 %v715, %v713
    %v782 = vpack.c.bf16 %v716, %v714
    %v783 = vpack.c.bf16 %v719, %v717
    %v784 = vpack.c.bf16 %v720, %v718
    %v785 = vld [vmem:[%s3] sm:$0xf]
    %v786 = vld [vmem:[%s3 + $0x4] sm:$0xf]
    %v787 = vld [vmem:[%s3 + $0x8] sm:$0xf]
    %v788 = vld [vmem:[%s3 + $0xc] sm:$0xf]
    %v789 = vld [vmem:[%s3 + $0x10] sm:$0xf]
    %v790 = vld [vmem:[%s3 + $0x14] sm:$0xf]
    %v791 = vld [vmem:[%s3 + $0x18] sm:$0xf]
    %v792 = vld [vmem:[%s3 + $0x1c] sm:$0xf]
    %v793 = vld [vmem:[%s3 + $0x20] sm:$0xf]
    %v794 = vld [vmem:[%s3 + $0x24] sm:$0xf]
    %v795 = vld [vmem:[%s3 + $0x28] sm:$0xf]
    %v796 = vld [vmem:[%s3 + $0x2c] sm:$0xf]
    %v797 = vld [vmem:[%s3 + $0x30] sm:$0xf]
    %v798 = vld [vmem:[%s3 + $0x34] sm:$0xf]
    %v799 = vld [vmem:[%s3 + $0x38] sm:$0xf]
    %v800 = vld [vmem:[%s3 + $0x3c] sm:$0xf]
    %v801 = vld [vmem:[%s3 + $0x40] sm:$0xf]
    %v802 = vld [vmem:[%s3 + $0x44] sm:$0xf]
    %v803 = vld [vmem:[%s3 + $0x48] sm:$0xf]
    %v804 = vld [vmem:[%s3 + $0x4c] sm:$0xf]
    %v805 = vld [vmem:[%s3 + $0x50] sm:$0xf]
    %v806 = vld [vmem:[%s3 + $0x54] sm:$0xf]
    %v807 = vld [vmem:[%s3 + $0x58] sm:$0xf]
    %v808 = vld [vmem:[%s3 + $0x5c] sm:$0xf]
    %v809 = vld [vmem:[%s3 + $0x60] sm:$0xf]
    %v810 = vld [vmem:[%s3 + $0x64] sm:$0xf]
    %v811 = vld [vmem:[%s3 + $0x68] sm:$0xf]
    %v812 = vld [vmem:[%s3 + $0x6c] sm:$0xf]
    %v813 = vld [vmem:[%s3 + $0x70] sm:$0xf]
    %v814 = vld [vmem:[%s3 + $0x74] sm:$0xf]
    %v815 = vld [vmem:[%s3 + $0x78] sm:$0xf]
    %v816 = vld [vmem:[%s3 + $0x7c] sm:$0xf]
    %v817 = vld [vmem:[%s4] sm:$0x1]
    %v819 = vlaneseq
    %v820 = vshrl.u32 %v819, 7
    %v821 = vsub.s32 0, %v820
    %v822 = vrot.slane %v817, %v821
    %v856 = vunpack.c.l.b16 %v785
    %v857 = vunpack.c.l.b16 %v786
    %v858 = vunpack.c.l.b16 %v787
    %v859 = vunpack.c.l.b16 %v788
    %v860 = vunpack.c.l.b16 %v789
    %v861 = vunpack.c.l.b16 %v790
    %v862 = vunpack.c.l.b16 %v791
    %v863 = vunpack.c.l.b16 %v792
    %v864 = vunpack.c.l.b16 %v793
    %v865 = vunpack.c.l.b16 %v794
    %v866 = vunpack.c.l.b16 %v795
    %v867 = vunpack.c.l.b16 %v796
    %v868 = vunpack.c.l.b16 %v797
    %v869 = vunpack.c.l.b16 %v798
    %v870 = vunpack.c.l.b16 %v799
    %v871 = vunpack.c.l.b16 %v800
    %v872 = vunpack.c.l.b16 %v801
    %v873 = vunpack.c.l.b16 %v802
    %v874 = vunpack.c.l.b16 %v803
    %v875 = vunpack.c.l.b16 %v804
    %v876 = vunpack.c.l.b16 %v805
    %v877 = vunpack.c.l.b16 %v806
    %v878 = vunpack.c.l.b16 %v807
    %v879 = vunpack.c.l.b16 %v808
    %v880 = vunpack.c.l.b16 %v809
    %v881 = vunpack.c.l.b16 %v810
    %v882 = vunpack.c.l.b16 %v811
    %v883 = vunpack.c.l.b16 %v812
    %v884 = vunpack.c.l.b16 %v813
    %v885 = vunpack.c.l.b16 %v814
    %v886 = vunpack.c.l.b16 %v815
    %v887 = vunpack.c.l.b16 %v816
    %v888 = vpack.c.b16 %v857, %v856
    %v889 = vpack.c.b16 %v859, %v858
    %v890 = vpack.c.b16 %v861, %v860
    %v891 = vpack.c.b16 %v863, %v862
    %v892 = vpack.c.b16 %v865, %v864
    %v893 = vpack.c.b16 %v867, %v866
    %v894 = vpack.c.b16 %v869, %v868
    %v895 = vpack.c.b16 %v871, %v870
    %v896 = vpack.c.b16 %v873, %v872
    %v897 = vpack.c.b16 %v875, %v874
    %v898 = vpack.c.b16 %v877, %v876
    %v899 = vpack.c.b16 %v879, %v878
    %v900 = vpack.c.b16 %v881, %v880
    %v901 = vpack.c.b16 %v883, %v882
    %v902 = vpack.c.b16 %v885, %v884
    %v903 = vpack.c.b16 %v887, %v886
    %920 = vmatprep.subr.bf16.mxu0 0
    %921 = vmatpush1.bf16.msra.mxu0 %v888
    %922 = vmatprep.subr.bf16.mxu0 0
    %923 = vmatpush1.bf16.msra.mxu0 %v889
    %924 = vmatprep.subr.bf16.mxu0 0
    %925 = vmatpush1.bf16.msra.mxu0 %v890
    %926 = vmatprep.subr.bf16.mxu0 0
    %927 = vmatpush1.bf16.msra.mxu0 %v891
    %928 = vmatprep.subr.bf16.mxu0 0
    %929 = vmatpush1.bf16.msra.mxu0 %v892
    %930 = vmatprep.subr.bf16.mxu0 0
    %931 = vmatpush1.bf16.msra.mxu0 %v893
    %932 = vmatprep.subr.bf16.mxu0 0
    %933 = vmatpush1.bf16.msra.mxu0 %v894
    %934 = vmatprep.subr.bf16.mxu0 0
    %935 = vmatpush1.bf16.msra.mxu0 %v895
    %936 = vmatprep.subr.bf16.mxu0 0
    %937 = vmatpush1.bf16.msra.mxu0 %v896
    %938 = vmatprep.subr.bf16.mxu0 0
    %939 = vmatpush1.bf16.msra.mxu0 %v897
    %940 = vmatprep.subr.bf16.mxu0 0
    %941 = vmatpush1.bf16.msra.mxu0 %v898
    %942 = vmatprep.subr.bf16.mxu0 0
    %943 = vmatpush1.bf16.msra.mxu0 %v899
    %944 = vmatprep.subr.bf16.mxu0 0
    %945 = vmatpush1.bf16.msra.mxu0 %v900
    %946 = vmatprep.subr.bf16.mxu0 0
    %947 = vmatpush1.bf16.msra.mxu0 %v901
    %948 = vmatprep.subr.bf16.mxu0 0
    %949 = vmatpush1.bf16.msra.mxu0 %v902
    %950 = vmatprep.subr.bf16.mxu0 0
    %951 = vmatpush1.bf16.msra.mxu0 %v903
    %952 = vmatprep.mubr.bf16.mxu0 %v722
    %953 = vmatmul.mubr.bf16.gmra.mrb[0].mxu0 %v721
    %v954 = vpop.f32.mrb[0].mxu0
    %v955 = vadd.f32 %v822, %v954
    %v956 = vpop.f32.mrb[0].mxu0
    %v957 = vpop.f32.mrb[0].mxu0
    %v958 = vadd.f32 %v822, %v957
    %v959 = vpop.f32.mrb[0].mxu0
    %960 = vmatprep.mubr.bf16.mxu0 %v724
    %961 = vmatmul.mubr.bf16.gmra.mrb[0].mxu0 %v723
    %v962 = vpop.f32.mrb[0].mxu0
    %v963 = vadd.f32 %v822, %v962
    %v964 = vpop.f32.mrb[0].mxu0
    %v965 = vpop.f32.mrb[0].mxu0
    %v966 = vadd.f32 %v822, %v965
    %v967 = vpop.f32.mrb[0].mxu0
    %968 = vmatprep.mubr.bf16.mxu0 %v726
    %969 = vmatmul.mubr.bf16.gmra.mrb[0].mxu0 %v725
    %v970 = vpop.f32.mrb[0].mxu0
    %v971 = vadd.f32 %v822, %v970
    %v972 = vpop.f32.mrb[0].mxu0
    %v973 = vpop.f32.mrb[0].mxu0
    %v974 = vadd.f32 %v822, %v973
    %v975 = vpop.f32.mrb[0].mxu0
    %976 = vmatprep.mubr.bf16.mxu0 %v728
    %977 = vmatmul.mubr.bf16.gmra.mrb[0].mxu0 %v727
    %v978 = vpop.f32.mrb[0].mxu0
    %v979 = vadd.f32 %v822, %v978
    %v980 = vpop.f32.mrb[0].mxu0
    %v981 = vpop.f32.mrb[0].mxu0
    %v982 = vadd.f32 %v822, %v981
    %v983 = vpop.f32.mrb[0].mxu0
    %984 = vmatprep.mubr.bf16.mxu0 %v730
    %985 = vmatmul.mubr.bf16.gmra.mrb[0].mxu0 %v729
    %v986 = vpop.f32.mrb[0].mxu0
    %v987 = vadd.f32 %v822, %v986
    %v988 = vpop.f32.mrb[0].mxu0
    %v989 = vpop.f32.mrb[0].mxu0
    %v990 = vadd.f32 %v822, %v989
    %v991 = vpop.f32.mrb[0].mxu0
    %992 = vmatprep.mubr.bf16.mxu0 %v732
    %993 = vmatmul.mubr.bf16.gmra.mrb[0].mxu0 %v731
    %v994 = vpop.f32.mrb[0].mxu0
    %v995 = vadd.f32 %v822, %v994
    %v996 = vpop.f32.mrb[0].mxu0
    %v997 = vpop.f32.mrb[0].mxu0
    %v998 = vadd.f32 %v822, %v997
    %v999 = vpop.f32.mrb[0].mxu0
    %1000 = vmatprep.mubr.bf16.mxu0 %v734
    %1001 = vmatmul.mubr.bf16.gmra.mrb[0].mxu0 %v733
    %v1002 = vpop.f32.mrb[0].mxu0
    %v1003 = vadd.f32 %v822, %v1002
    %v1004 = vpop.f32.mrb[0].mxu0
    %v1005 = vpop.f32.mrb[0].mxu0
    %v1006 = vadd.f32 %v822, %v1005
    %v1007 = vpop.f32.mrb[0].mxu0
    %1008 = vmatprep.mubr.bf16.mxu0 %v736
    %1009 = vmatmul.mubr.bf16.gmra.mrb[0].mxu0 %v735
    %v1010 = vpop.f32.mrb[0].mxu0
    %v1011 = vadd.f32 %v822, %v1010
    %v1012 = vpop.f32.mrb[0].mxu0
    %v1013 = vpop.f32.mrb[0].mxu0
    %v1014 = vadd.f32 %v822, %v1013
    %v1015 = vpop.f32.mrb[0].mxu0
    %1016 = vmatprep.mubr.bf16.mxu0 %v738
    %1017 = vmatmul.mubr.bf16.gmra.mrb[0].mxu0 %v737
    %v1018 = vpop.f32.mrb[0].mxu0
    %v1019 = vadd.f32 %v822, %v1018
    %v1020 = vpop.f32.mrb[0].mxu0
    %v1021 = vpop.f32.mrb[0].mxu0
    %v1022 = vadd.f32 %v822, %v1021
    %v1023 = vpop.f32.mrb[0].mxu0
    %1024 = vmatprep.mubr.bf16.mxu0 %v740
    %1025 = vmatmul.mubr.bf16.gmra.mrb[0].mxu0 %v739
    %v1026 = vpop.f32.mrb[0].mxu0
    %v1027 = vadd.f32 %v822, %v1026
    %v1028 = vpop.f32.mrb[0].mxu0
    %v1029 = vpop.f32.mrb[0].mxu0
    %v1030 = vadd.f32 %v822, %v1029
    %v1031 = vpop.f32.mrb[0].mxu0
    %1032 = vmatprep.mubr.bf16.mxu0 %v742
    %1033 = vmatmul.mubr.bf16.gmra.mrb[0].mxu0 %v741
    %v1034 = vpop.f32.mrb[0].mxu0
    %v1035 = vadd.f32 %v822, %v1034
    %v1036 = vpop.f32.mrb[0].mxu0
    %v1037 = vpop.f32.mrb[0].mxu0
    %v1038 = vadd.f32 %v822, %v1037
    %v1039 = vpop.f32.mrb[0].mxu0
    %1040 = vmatprep.mubr.bf16.mxu0 %v744
    %1041 = vmatmul.mubr.bf16.gmra.mrb[0].mxu0 %v743
    %v1042 = vpop.f32.mrb[0].mxu0
    %v1043 = vadd.f32 %v822, %v1042
    %v1044 = vpop.f32.mrb[0].mxu0
    %v1045 = vpop.f32.mrb[0].mxu0
    %v1046 = vadd.f32 %v822, %v1045
    %v1047 = vpop.f32.mrb[0].mxu0
    %1048 = vmatprep.mubr.bf16.mxu0 %v746
    %1049 = vmatmul.mubr.bf16.gmra.mrb[0].mxu0 %v745
    %v1050 = vpop.f32.mrb[0].mxu0
    %v1051 = vadd.f32 %v822, %v1050
    %v1052 = vpop.f32.mrb[0].mxu0
    %v1053 = vpop.f32.mrb[0].mxu0
    %v1054 = vadd.f32 %v822, %v1053
    %v1055 = vpop.f32.mrb[0].mxu0
    %1056 = vmatprep.mubr.bf16.mxu0 %v748
    %1057 = vmatmul.mubr.bf16.gmra.mrb[0].mxu0 %v747
    %v1058 = vpop.f32.mrb[0].mxu0
    %v1059 = vadd.f32 %v822, %v1058
    %v1060 = vpop.f32.mrb[0].mxu0
    %v1061 = vpop.f32.mrb[0].mxu0
    %v1062 = vadd.f32 %v822, %v1061
    %v1063 = vpop.f32.mrb[0].mxu0
    %1064 = vmatprep.mubr.bf16.mxu0 %v750
    %1065 = vmatmul.mubr.bf16.gmra.mrb[0].mxu0 %v749
    %v1066 = vpop.f32.mrb[0].mxu0
    %v1067 = vadd.f32 %v822, %v1066
    %v1068 = vpop.f32.mrb[0].mxu0
    %v1069 = vpop.f32.mrb[0].mxu0
    %v1070 = vadd.f32 %v822, %v1069
    %v1071 = vpop.f32.mrb[0].mxu0
    %1072 = vmatprep.mubr.bf16.mxu0 %v752
    %1073 = vmatmul.mubr.bf16.gmra.mrb[0].mxu0 %v751
    %v1074 = vpop.f32.mrb[0].mxu0
    %v1075 = vadd.f32 %v822, %v1074
    %v1076 = vpop.f32.mrb[0].mxu0
    %v1077 = vpop.f32.mrb[0].mxu0
    %v1078 = vadd.f32 %v822, %v1077
    %v1079 = vpop.f32.mrb[0].mxu0
    %1080 = vmatprep.mubr.bf16.mxu0 %v754
    %1081 = vmatmul.mubr.bf16.gmra.mrb[0].mxu0 %v753
    %v1082 = vpop.f32.mrb[0].mxu0
    %v1083 = vadd.f32 %v822, %v1082
    %v1084 = vpop.f32.mrb[0].mxu0
    %v1085 = vpop.f32.mrb[0].mxu0
    %v1086 = vadd.f32 %v822, %v1085
    %v1087 = vpop.f32.mrb[0].mxu0
    %1088 = vmatprep.mubr.bf16.mxu0 %v756
    %1089 = vmatmul.mubr.bf16.gmra.mrb[0].mxu0 %v755
    %v1090 = vpop.f32.mrb[0].mxu0
    %v1091 = vadd.f32 %v822, %v1090
    %v1092 = vpop.f32.mrb[0].mxu0
    %v1093 = vpop.f32.mrb[0].mxu0
    %v1094 = vadd.f32 %v822, %v1093
    %v1095 = vpop.f32.mrb[0].mxu0
    %1096 = vmatprep.mubr.bf16.mxu0 %v758
    %1097 = vmatmul.mubr.bf16.gmra.mrb[0].mxu0 %v757
    %v1098 = vpop.f32.mrb[0].mxu0
    %v1099 = vadd.f32 %v822, %v1098
    %v1100 = vpop.f32.mrb[0].mxu0
    %v1101 = vpop.f32.mrb[0].mxu0
    %v1102 = vadd.f32 %v822, %v1101
    %v1103 = vpop.f32.mrb[0].mxu0
    %1104 = vmatprep.mubr.bf16.mxu0 %v760
    %1105 = vmatmul.mubr.bf16.gmra.mrb[0].mxu0 %v759
    %v1106 = vpop.f32.mrb[0].mxu0
    %v1107 = vadd.f32 %v822, %v1106
    %v1108 = vpop.f32.mrb[0].mxu0
    %v1109 = vpop.f32.mrb[0].mxu0
    %v1110 = vadd.f32 %v822, %v1109
    %v1111 = vpop.f32.mrb[0].mxu0
    %1112 = vmatprep.mubr.bf16.mxu0 %v762
    %1113 = vmatmul.mubr.bf16.gmra.mrb[0].mxu0 %v761
    %v1114 = vpop.f32.mrb[0].mxu0
    %v1115 = vadd.f32 %v822, %v1114
    %v1116 = vpop.f32.mrb[0].mxu0
    %v1117 = vpop.f32.mrb[0].mxu0
    %v1118 = vadd.f32 %v822, %v1117
    %v1119 = vpop.f32.mrb[0].mxu0
    %1120 = vmatprep.mubr.bf16.mxu0 %v764
    %1121 = vmatmul.mubr.bf16.gmra.mrb[0].mxu0 %v763
    %v1122 = vpop.f32.mrb[0].mxu0
    %v1123 = vadd.f32 %v822, %v1122
    %v1124 = vpop.f32.mrb[0].mxu0
    %v1125 = vpop.f32.mrb[0].mxu0
    %v1126 = vadd.f32 %v822, %v1125
    %v1127 = vpop.f32.mrb[0].mxu0
    %1128 = vmatprep.mubr.bf16.mxu0 %v766
    %1129 = vmatmul.mubr.bf16.gmra.mrb[0].mxu0 %v765
    %v1130 = vpop.f32.mrb[0].mxu0
    %v1131 = vadd.f32 %v822, %v1130
    %v1132 = vpop.f32.mrb[0].mxu0
    %v1133 = vpop.f32.mrb[0].mxu0
    %v1134 = vadd.f32 %v822, %v1133
    %v1135 = vpop.f32.mrb[0].mxu0
    %1136 = vmatprep.mubr.bf16.mxu0 %v768
    %1137 = vmatmul.mubr.bf16.gmra.mrb[0].mxu0 %v767
    %v1138 = vpop.f32.mrb[0].mxu0
    %v1139 = vadd.f32 %v822, %v1138
    %v1140 = vpop.f32.mrb[0].mxu0
    %v1141 = vpop.f32.mrb[0].mxu0
    %v1142 = vadd.f32 %v822, %v1141
    %v1143 = vpop.f32.mrb[0].mxu0
    %1144 = vmatprep.mubr.bf16.mxu0 %v770
    %1145 = vmatmul.mubr.bf16.gmra.mrb[0].mxu0 %v769
    %v1146 = vpop.f32.mrb[0].mxu0
    %v1147 = vadd.f32 %v822, %v1146
    %v1148 = vpop.f32.mrb[0].mxu0
    %v1149 = vpop.f32.mrb[0].mxu0
    %v1150 = vadd.f32 %v822, %v1149
    %v1151 = vpop.f32.mrb[0].mxu0
    %1152 = vmatprep.mubr.bf16.mxu0 %v772
    %1153 = vmatmul.mubr.bf16.gmra.mrb[0].mxu0 %v771
    %v1154 = vpop.f32.mrb[0].mxu0
    %v1155 = vadd.f32 %v822, %v1154
    %v1156 = vpop.f32.mrb[0].mxu0
    %v1157 = vpop.f32.mrb[0].mxu0
    %v1158 = vadd.f32 %v822, %v1157
    %v1159 = vpop.f32.mrb[0].mxu0
    %1160 = vmatprep.mubr.bf16.mxu0 %v774
    %1161 = vmatmul.mubr.bf16.gmra.mrb[0].mxu0 %v773
    %v1162 = vpop.f32.mrb[0].mxu0
    %v1163 = vadd.f32 %v822, %v1162
    %v1164 = vpop.f32.mrb[0].mxu0
    %v1165 = vpop.f32.mrb[0].mxu0
    %v1166 = vadd.f32 %v822, %v1165
    %v1167 = vpop.f32.mrb[0].mxu0
    %1168 = vmatprep.mubr.bf16.mxu0 %v776
    %1169 = vmatmul.mubr.bf16.gmra.mrb[0].mxu0 %v775
    %v1170 = vpop.f32.mrb[0].mxu0
    %v1171 = vadd.f32 %v822, %v1170
    %v1172 = vpop.f32.mrb[0].mxu0
    %v1173 = vpop.f32.mrb[0].mxu0
    %v1174 = vadd.f32 %v822, %v1173
    %v1175 = vpop.f32.mrb[0].mxu0
    %1176 = vmatprep.mubr.bf16.mxu0 %v778
    %1177 = vmatmul.mubr.bf16.gmra.mrb[0].mxu0 %v777
    %v1178 = vpop.f32.mrb[0].mxu0
    %v1179 = vadd.f32 %v822, %v1178
    %v1180 = vpop.f32.mrb[0].mxu0
    %v1181 = vpop.f32.mrb[0].mxu0
    %v1182 = vadd.f32 %v822, %v1181
    %v1183 = vpop.f32.mrb[0].mxu0
    %1184 = vmatprep.mubr.bf16.mxu0 %v780
    %1185 = vmatmul.mubr.bf16.gmra.mrb[0].mxu0 %v779
    %v1186 = vpop.f32.mrb[0].mxu0
    %v1187 = vadd.f32 %v822, %v1186
    %v1188 = vpop.f32.mrb[0].mxu0
    %v1189 = vpop.f32.mrb[0].mxu0
    %v1190 = vadd.f32 %v822, %v1189
    %v1191 = vpop.f32.mrb[0].mxu0
    %1192 = vmatprep.mubr.bf16.mxu0 %v782
    %1193 = vmatmul.mubr.bf16.gmra.mrb[0].mxu0 %v781
    %v1194 = vpop.f32.mrb[0].mxu0
    %v1195 = vadd.f32 %v822, %v1194
    %v1196 = vpop.f32.mrb[0].mxu0
    %v1197 = vpop.f32.mrb[0].mxu0
    %v1198 = vadd.f32 %v822, %v1197
    %v1199 = vpop.f32.mrb[0].mxu0
    %1200 = vmatprep.mubr.bf16.mxu0 %v784
    %1201 = vmatmul.mubr.bf16.gmra.mrb[0].mxu0 %v783
    %v1202 = vpop.f32.mrb[0].mxu0
    %v1203 = vadd.f32 %v822, %v1202
    %v1204 = vpop.f32.mrb[0].mxu0
    %v1205 = vpop.f32.mrb[0].mxu0
    %v1206 = vadd.f32 %v822, %v1205
    %v1207 = vpop.f32.mrb[0].mxu0
    %1208 = vdwg.mxu0
    %1209 = vst [vmem:[#allocation5] sm:$0xff] %v955
    %1210 = vst [vmem:[#allocation5 + $0x8] sm:$0xff] %v958
    %1211 = vst [vmem:[#allocation5 + $0x10] sm:$0xff] %v963
    %1212 = vst [vmem:[#allocation5 + $0x18] sm:$0xff] %v966
    %1213 = vst [vmem:[#allocation5 + $0x20] sm:$0xff] %v971
    %1214 = vst [vmem:[#allocation5 + $0x28] sm:$0xff] %v974
    %1215 = vst [vmem:[#allocation5 + $0x30] sm:$0xff] %v979
    %1216 = vst [vmem:[#allocation5 + $0x38] sm:$0xff] %v982
    %1217 = vst [vmem:[#allocation5 + $0x40] sm:$0xff] %v987
    %1218 = vst [vmem:[#allocation5 + $0x48] sm:$0xff] %v990
    %1219 = vst [vmem:[#allocation5 + $0x50] sm:$0xff] %v995
    %1220 = vst [vmem:[#allocation5 + $0x58] sm:$0xff] %v998
    %1221 = vst [vmem:[#allocation5 + $0x60] sm:$0xff] %v1003
    %1222 = vst [vmem:[#allocation5 + $0x68] sm:$0xff] %v1006
    %1223 = vst [vmem:[#allocation5 + $0x70] sm:$0xff] %v1011
    %1224 = vst [vmem:[#allocation5 + $0x78] sm:$0xff] %v1014
    %1225 = vst [vmem:[#allocation5 + $0x80] sm:$0xff] %v1019
    %1226 = vst [vmem:[#allocation5 + $0x88] sm:$0xff] %v1022
    %1227 = vst [vmem:[#allocation5 + $0x90] sm:$0xff] %v1027
    %1228 = vst [vmem:[#allocation5 + $0x98] sm:$0xff] %v1030
    %1229 = vst [vmem:[#allocation5 + $0xa0] sm:$0xff] %v1035
    %1230 = vst [vmem:[#allocation5 + $0xa8] sm:$0xff] %v1038
    %1231 = vst [vmem:[#allocation5 + $0xb0] sm:$0xff] %v1043
    %1232 = vst [vmem:[#allocation5 + $0xb8] sm:$0xff] %v1046
    %1233 = vst [vmem:[#allocation5 + $0xc0] sm:$0xff] %v1051
    %1234 = vst [vmem:[#allocation5 + $0xc8] sm:$0xff] %v1054
    %1235 = vst [vmem:[#allocation5 + $0xd0] sm:$0xff] %v1059
    %1236 = vst [vmem:[#allocation5 + $0xd8] sm:$0xff] %v1062
    %1237 = vst [vmem:[#allocation5 + $0xe0] sm:$0xff] %v1067
    %1238 = vst [vmem:[#allocation5 + $0xe8] sm:$0xff] %v1070
    %1239 = vst [vmem:[#allocation5 + $0xf0] sm:$0xff] %v1075
    %1240 = vst [vmem:[#allocation5 + $0xf8] sm:$0xff] %v1078
    %1241 = vst [vmem:[#allocation5 + $0x100] sm:$0xff] %v1083
    %1242 = vst [vmem:[#allocation5 + $0x108] sm:$0xff] %v1086
    %1243 = vst [vmem:[#allocation5 + $0x110] sm:$0xff] %v1091
    %1244 = vst [vmem:[#allocation5 + $0x118] sm:$0xff] %v1094
    %1245 = vst [vmem:[#allocation5 + $0x120] sm:$0xff] %v1099
    %1246 = vst [vmem:[#allocation5 + $0x128] sm:$0xff] %v1102
    %1247 = vst [vmem:[#allocation5 + $0x130] sm:$0xff] %v1107
    %1248 = vst [vmem:[#allocation5 + $0x138] sm:$0xff] %v1110
    %1249 = vst [vmem:[#allocation5 + $0x140] sm:$0xff] %v1115
    %1250 = vst [vmem:[#allocation5 + $0x148] sm:$0xff] %v1118
    %1251 = vst [vmem:[#allocation5 + $0x150] sm:$0xff] %v1123
    %1252 = vst [vmem:[#allocation5 + $0x158] sm:$0xff] %v1126
    %1253 = vst [vmem:[#allocation5 + $0x160] sm:$0xff] %v1131
    %1254 = vst [vmem:[#allocation5 + $0x168] sm:$0xff] %v1134
    %1255 = vst [vmem:[#allocation5 + $0x170] sm:$0xff] %v1139
    %1256 = vst [vmem:[#allocation5 + $0x178] sm:$0xff] %v1142
    %1257 = vst [vmem:[#allocation5 + $0x180] sm:$0xff] %v1147
    %1258 = vst [vmem:[#allocation5 + $0x188] sm:$0xff] %v1150
    %1259 = vst [vmem:[#allocation5 + $0x190] sm:$0xff] %v1155
    %1260 = vst [vmem:[#allocation5 + $0x198] sm:$0xff] %v1158
    %1261 = vst [vmem:[#allocation5 + $0x1a0] sm:$0xff] %v1163
    %1262 = vst [vmem:[#allocation5 + $0x1a8] sm:$0xff] %v1166
    %1263 = vst [vmem:[#allocation5 + $0x1b0] sm:$0xff] %v1171
    %1264 = vst [vmem:[#allocation5 + $0x1b8] sm:$0xff] %v1174
    %1265 = vst [vmem:[#allocation5 + $0x1c0] sm:$0xff] %v1179
    %1266 = vst [vmem:[#allocation5 + $0x1c8] sm:$0xff] %v1182
    %1267 = vst [vmem:[#allocation5 + $0x1d0] sm:$0xff] %v1187
    %1268 = vst [vmem:[#allocation5 + $0x1d8] sm:$0xff] %v1190
    %1269 = vst [vmem:[#allocation5 + $0x1e0] sm:$0xff] %v1195
    %1270 = vst [vmem:[#allocation5 + $0x1e8] sm:$0xff] %v1198
    %1271 = vst [vmem:[#allocation5 + $0x1f0] sm:$0xff] %v1203
    %1272 = vst [vmem:[#allocation5 + $0x1f8] sm:$0xff] %v1206
    // Predicated region
    $region26: #{ode_func_forward.1} parent=1 // pred_check
      _
    $region27: #{ode_func_forward.1} parent=1 // pred_check_branch
      %1274 = sbr.rel (0) target = $region29
    $region28: #{ode_func_forward.1} parent=1 // pred_region
      %s1276 = ssub.s32 8192, 8192
      %1277 = vsyncadd [#allocation4], %s1276
      %s1278 = sshll.u32 [#allocation5], 4
      %s1279 = int_to_ptr.vmem [resolvable:$true] %s1278
      %1284 = dma.vmem_to_hbm [thread:$0]  %s1279, 8192, %s5, [#allocation4], 128, 128, 8
    $region29: #{ode_func_forward.1} parent=1 // pred_fallthru
      _
    // Predicated region
    $region30: #{ode_func_forward.1} parent=1 // pred_check
      _
    $region31: #{ode_func_forward.1} parent=1 // pred_check_branch
      %1286 = sbr.rel (0) target = $region33
    $region32: #{ode_func_forward.1} parent=1 // pred_region
      %1287 = dma.done [#allocation4], 8192
    $region33: #{ode_func_forward.1} parent=1 // pred_fallthru
      _
    %1288 = vsyncpa [#allocation3], 1
    %1289 = vsyncpa [#allocation4], 1

</llo_original>
